<compile_context>
chip_gen: v6e
topology: v6e:2x2x1
jax: 0.10.0
libtpu: 0.0.40
codegen_flags: <defaults>
</compile_context>

<pallas_src>
import jax
import jax.numpy as jnp
from jax.experimental import pallas as pl
from jax.experimental.pallas import tpu as pltpu


def _instance_norm_kernel(x_ref, o_ref):
    # x_ref block: (row_block, hw) -- each row is one (n, c) instance.
    x = x_ref[...]
    hw = x.shape[-1]
    # Multiply by precomputed reciprocals instead of dividing (VPU lane-divide
    # is the most expensive vector op in the body).
    inv_hw = jnp.float32(1.0 / hw)
    # torch.var default is unbiased (/(hw-1)); max() only avoids a trace-time
    # ZeroDivisionError for hw == 1 (result is still NaN, matching torch).
    inv_hwm1 = jnp.float32(1.0 / max(hw - 1, 1))

    # Single-pass statistics, accumulated in f32. No full-tile f32 `centered`
    # temporary is bound: the casts below fuse into the reductions / the final
    # store, halving the f32 working set of the old two-pass body.
    s = jnp.sum(x, axis=-1, keepdims=True, dtype=jnp.float32)
    ssq = jnp.sum(jnp.square(x.astype(jnp.float32)), axis=-1, keepdims=True)
    mean = s * inv_hw
    # var = (sum(x^2) - sum(x)*mean) / (hw - 1).  Mild cancellation risk only
    # when |mean| >> std; accumulation is f32 and the result is validated
    # against the two-pass reference at 1e-5.
    var = (ssq - s * mean) * inv_hwm1

    # rsqrt goes to the EUP slot; normalize via multiply, not divide.
    scale = jax.lax.rsqrt(var)
    o_ref[...] = ((x.astype(jnp.float32) - mean) * scale).astype(o_ref.dtype)


def _round_up(x, m):
    return (x + m - 1) // m * m


def _pick_row_block(rows, hw, dtype_bytes):
    """Pick how many (n, c) rows are processed per grid step."""
    try:
        vmem_cap = pltpu.get_tpu_info().vmem_capacity_bytes
    except Exception:  # conservative fallback (v7x per-TC VMEM)
        vmem_cap = 64 * 1024 * 1024

    # Per in-flight row: double-buffered input + double-buffered output
    # (4 * dtype_bytes / elem) plus a small f32 working-set headroom for the
    # single-pass statistics body (~4 B / elem).
    per_row_bytes = hw * (4 * dtype_bytes + 4)

    # VMEM ceiling: ~1/5 of physical capacity for pipeline buffers, leaving
    # room for Mosaic internal scratch (this is what's tight on v7x's 64 MiB).
    vmem_rows = max((vmem_cap // 5) // max(per_row_bytes, 1), 8)

    # Bytes-based target: ~4 MiB of input per grid step so each step moves
    # enough HBM to amortize the ~0.35 us per-step overhead, even at small hw
    # (CNN-sized spatial dims), instead of the old fixed 1024-row cap.
    target_rows = max((4 << 20) // max(hw * dtype_bytes, 1), 8)

    row_block = min(vmem_rows, target_rows)

    # Megacore (v7x, 2 TCs): guarantee >= 2 grid blocks whenever the problem
    # has more than one sublane-group of rows, so the "parallel" row axis can
    # actually shard across both cores instead of running on one.
    if rows > 8:
        row_block = min(row_block, _round_up((rows + 1) // 2, 8))

    row_block = max(8, min(row_block, _round_up(rows, 8)))
    row_block = _round_up(row_block, 8)
    return row_block, vmem_cap


def mla_instance_norm_2d(x):
    """x: (N, C, H, W) -> (N, C, H, W), matching MLAInstanceNorm2d.forward (affine=False)."""
    N, C, H, W = x.shape
    rows = N * C
    hw = H * W
    dtype_bytes = jnp.dtype(x.dtype).itemsize

    # Lane-dense slab: each row is one (n, c) instance, spatial dims along the
    # last (lane) axis.  No jnp.pad (a full extra HBM read+write pass on an
    # HBM-bound kernel): the grid uses cdiv and Pallas masks the partial last
    # row block; rows are independent, so garbage rows never affect valid rows
    # and their writes are clipped.
    # TODO(synk): when hw % 128 != 0 (e.g. 49/196/784) the last VMEM dim is not
    #             lane-dense (masked partial stores); a repack/pad path would
    #             need an extra layout pass, so it is not implemented here.
    x2d = x.reshape(rows, hw)

    row_block, vmem_cap = _pick_row_block(rows, hw, dtype_bytes)
    grid = (pl.cdiv(rows, row_block),)

    # Raise the scoped VMEM limit (defaults: 16 MiB v5e, 32 MiB v6e/v7x). The
    # limit is a cap, not an allocation -- leave generous slack for Mosaic
    # internal scratch; block sizes are already governed by _pick_row_block.
    vmem_limit = int(max(vmem_cap - (16 << 20), 32 << 20))

    cost = pl.CostEstimate(
        flops=5 * rows * hw,
        transcendentals=rows,
        bytes_accessed=2 * rows * hw * dtype_bytes,
    )

    out2d = pl.pallas_call(
        _instance_norm_kernel,
        out_shape=jax.ShapeDtypeStruct((rows, hw), x.dtype),
        grid_spec=pltpu.PrefetchScalarGridSpec(
            num_scalar_prefetch=0,
            grid=grid,
            in_specs=[pl.BlockSpec((row_block, hw), lambda i: (i, 0))],
            out_specs=pl.BlockSpec((row_block, hw), lambda i: (i, 0)),
        ),
        compiler_params=pltpu.CompilerParams(
            # 1-D "parallel" grid so the row axis can shard across v7x's 2 TCs
            # (no-op on v5e/v6e single-TC chips).
            dimension_semantics=("parallel",),
            vmem_limit_bytes=vmem_limit,
        ),
        cost_estimate=cost,
    )(x2d)

    return out2d.reshape(N, C, H, W)


def _reference(x):
    x32 = x.astype(jnp.float32)
    mean = jnp.mean(x32, axis=(2, 3), keepdims=True)
    centered = x32 - mean
    hw = x.shape[2] * x.shape[3]
    var = jnp.sum(centered * centered, axis=(2, 3), keepdims=True) / (hw - 1)
    return (centered / jnp.sqrt(var)).astype(x.dtype)


if __name__ == "__main__":
    key = jax.random.PRNGKey(0)
    N, C, H, W = 2, 4, 16, 16  # num_features = C = 4
    x = jax.random.normal(key, (N, C, H, W), dtype=jnp.float32)

    out = jax.block_until_ready(mla_instance_norm_2d(x))

    ref = _reference(x)
    assert out.shape == (N, C, H, W)
    assert jnp.allclose(out, ref, atol=1e-5, rtol=1e-5), "mismatch vs reference"

    print("KERNEL_OK")
</pallas_src>

<mosaic_0001>
module attributes {stable_mosaic.version = 11 : i64} {
  func.func @_instance_norm_kernel(%arg0: i32, %arg1: memref<8x256xf32, #tpu.memory_space<vmem>>, %arg2: memref<8x256xf32, #tpu.memory_space<vmem>>) attributes {dimension_semantics = [#tpu.dimension_semantics<parallel>], iteration_bounds = array<i64: 1>, scalar_prefetch = 0 : i64, scratch_operands = 0 : i64, tpu.core_type = #tpu.core_type<tc>, window_params = [{transform_indices = @transform_0, window_bounds = array<i64: 8, 256>}, {transform_indices = @transform_1, window_bounds = array<i64: 8, 256>}]} {
    %c0 = arith.constant 0 : index
    %c0_0 = arith.constant 0 : index
    %0 = vector.load %arg1[%c0, %c0_0] : memref<8x256xf32, #tpu.memory_space<vmem>>, vector<8x256xf32>
    %cst = arith.constant dense<0.000000e+00> : vector<8xf32>
    %1 = vector.multi_reduction <add>, %0, %cst [1] : vector<8x256xf32> to vector<8xf32>
    %2 = vector.shape_cast %1 : vector<8xf32> to vector<8x1xf32>
    %3 = arith.mulf %0, %0 : vector<8x256xf32>
    %cst_1 = arith.constant dense<0.000000e+00> : vector<8xf32>
    %4 = vector.multi_reduction <add>, %3, %cst_1 [1] : vector<8x256xf32> to vector<8xf32>
    %5 = vector.shape_cast %4 : vector<8xf32> to vector<8x1xf32>
    %cst_2 = arith.constant 3.906250e-03 : f32
    %6 = vector.broadcast %cst_2 : f32 to vector<8x1xf32>
    %7 = arith.mulf %2, %6 : vector<8x1xf32>
    %8 = arith.mulf %2, %7 : vector<8x1xf32>
    %9 = arith.subf %5, %8 : vector<8x1xf32>
    %cst_3 = arith.constant 0.00392156886 : f32
    %10 = vector.broadcast %cst_3 : f32 to vector<8x1xf32>
    %11 = arith.mulf %9, %10 : vector<8x1xf32>
    %12 = math.rsqrt %11 : vector<8x1xf32>
    %13 = vector.broadcast %7 : vector<8x1xf32> to vector<8x256xf32>
    %14 = arith.subf %0, %13 : vector<8x256xf32>
    %15 = vector.broadcast %12 : vector<8x1xf32> to vector<8x256xf32>
    %16 = arith.mulf %14, %15 : vector<8x256xf32>
    %c0_4 = arith.constant 0 : index
    %c0_5 = arith.constant 0 : index
    %17 = vector.load %arg2[%c0_4, %c0_5] : memref<8x256xf32, #tpu.memory_space<vmem>>, vector<8x256xf32>
    tpu.vector_store %arg2[%c0_4, %c0_5], %16 {strides = array<i32>} : memref<8x256xf32, #tpu.memory_space<vmem>>, vector<8x256xf32>,
    return
  }
  func.func @transform_0(%arg0: i32) -> (i32, i32) {
    %c0_i32 = arith.constant 0 : i32
    %c0_i32_0 = arith.constant 0 : i32
    return %arg0, %c0_i32 : i32, i32
  }
  func.func @transform_1(%arg0: i32) -> (i32, i32) {
    %c0_i32 = arith.constant 0 : i32
    %c0_i32_0 = arith.constant 0 : i32
    return %arg0, %c0_i32 : i32, i32
  }
}

</mosaic_0001>

<llo_original>
// kernel: tpu_custom_call.1
$region0: #{tpu_custom_call.1}
  #allocation0 [shape = 'u32[]', space=smem, size = 0x4, offset = 0x4, fixed_abs, tag = 'smem constant byte address 0x4 - core index']
  #allocation1 [shape = 'u32[144,128]{1,0:T(1,128)}', space=vmem, size = 0x12000, scoped, tag = 'internal scratch']
  %s0 = inlined_call_operand.hbm [shape: f32[8,256], index: 0, kind: input, shape index: {}]
  %s1 = inlined_call_operand.hbm [shape: f32[8,256], index: 1, kind: output, shape index: {}]
  %s2 = sld [smem:[#allocation0]]
  $region18: #{tpu_custom_call.1} parent=0
    _
  %s4 = ssub.s32 1, %s2
  %s5 = scalar_select 0, %s4, %s2
  $region1: #{tpu_custom_call.1} parent=0
    #allocation2 [shape = 'u8[8192]{0}', space=vmem, size = 0x2000, scoped, tag = 'input window, operand 0, single buffered']
    #allocation3 [shape = 's32[1]{0}', space=sflag, size = 0x4, scoped, tag = 'scoped memory for tpu_custom_call.1']
    #allocation4 [shape = 's32[1]{0}', space=sflag, size = 0x4, scoped, tag = 'scoped memory for tpu_custom_call.1']
    #allocation5 [shape = 'u8[8192]{0}', space=vmem, size = 0x2000, scoped, tag = 'output window, operand 0, single buffered']
    %6 = vsyncpa [#allocation3], 0
    %7 = vsyncpa [#allocation4], 0
    // Predicated region
    $region2: #{tpu_custom_call.1} parent=1 // pred_check
      _
    $region3: #{tpu_custom_call.1} parent=1 // pred_check_branch
      %9 = sbr.rel (0) target = $region5
    $region4: #{tpu_custom_call.1} parent=1 // pred_region
      %s11 = ssub.s32 256, 256
      %12 = vsyncadd [#allocation3], %s11
      %s14 = sshll.u32 [#allocation2], 4
      %s15 = int_to_ptr.vmem [resolvable:$true] %s14
      %17 = dma.hbm_to_vmem [thread:$0]  %s0, 256, %s15, [#allocation3]
    $region5: #{tpu_custom_call.1} parent=1 // pred_fallthru
      _
    // Predicated region
    $region6: #{tpu_custom_call.1} parent=1 // pred_check
      _
    $region7: #{tpu_custom_call.1} parent=1 // pred_check_branch
      %19 = sbr.rel (0) target = $region9
    $region8: #{tpu_custom_call.1} parent=1 // pred_region
      %20 = dma.done [#allocation3], 256
    $region9: #{tpu_custom_call.1} parent=1 // pred_fallthru
      _
    %v21 = vld [vmem:[#allocation2] sm:$0xff]
    %v22 = vld [vmem:[#allocation2 + $0x8] sm:$0xff]
    %v23 = vadd.f32 %v21, %v22
    %24 = vadd.xlane.f32.xlu0 %v23
    %v25 = vpop.xlane.xlu0 %24
    %v26 = vmul.f32 %v21, %v21
    %v27 = vmul.f32 %v22, %v22
    %v28 = vadd.f32 %v26, %v27
    %29 = vadd.xlane.f32.xlu0 %v28
    %v30 = vpop.xlane.xlu0 %29
    %v31 = vmul.f32 %v25, 0.00390625
    %v32 = vmul.f32 %v25, %v31
    %v33 = vsub.f32 %v30, %v32
    %v34 = vmul.f32 %v33, 0.003921569
    %v35 = vrsqrt.pop %v34
    %v36 = vsub.f32 %v21, %v31
    %v37 = vsub.f32 %v22, %v31
    %v38 = vmul.f32 %v36, %v35
    %v39 = vmul.f32 %v37, %v35
    %40 = vst [vmem:[#allocation5] sm:$0xff] %v38
    %41 = vst [vmem:[#allocation5 + $0x8] sm:$0xff] %v39
    // Predicated region
    $region10: #{tpu_custom_call.1} parent=1 // pred_check
      _
    $region11: #{tpu_custom_call.1} parent=1 // pred_check_branch
      %43 = sbr.rel (0) target = $region13
    $region12: #{tpu_custom_call.1} parent=1 // pred_region
      %s45 = ssub.s32 256, 256
      %46 = vsyncadd [#allocation4], %s45
      %s48 = sshll.u32 [#allocation5], 4
      %s49 = int_to_ptr.vmem [resolvable:$true] %s48
      %51 = dma.vmem_to_hbm [thread:$0]  %s49, 256, %s1, [#allocation4]
    $region13: #{tpu_custom_call.1} parent=1 // pred_fallthru
      _
    // Predicated region
    $region14: #{tpu_custom_call.1} parent=1 // pred_check
      _
    $region15: #{tpu_custom_call.1} parent=1 // pred_check_branch
      %53 = sbr.rel (0) target = $region17
    $region16: #{tpu_custom_call.1} parent=1 // pred_region
      %54 = dma.done [#allocation4], 256
    $region17: #{tpu_custom_call.1} parent=1 // pred_fallthru
      _
    %55 = vsyncpa [#allocation3], 1
    %56 = vsyncpa [#allocation4], 1

</llo_original>
